<compile_context>
chip_gen: v5e
topology: v5e:2x2
jax: 0.10.0
libtpu: 0.0.40
codegen_flags: <defaults>
</compile_context>

<pallas_src>
import functools

import jax
import jax.numpy as jnp
import numpy as np
from jax.experimental import pallas as pl
from jax.experimental.pallas import tpu as pltpu


def _attn_kernel(h_ref, m_ref, a_ref, b_ref, out_ref, attn_ref):
    # Per-grid-step views:
    #   h_ref   : (TB, L, dim)  batch tile of hidden states
    #   m_ref   : (TB, L)       batch tile of the mask (lane-dense)
    #   a_ref   : (dim, da)     shared projection
    #   b_ref   : (1, da)       shared projection (row vector)
    #   out_ref : (TB, dim)     pooled outputs
    #   attn_ref: (TB, L)       attention weights (lane-dense)
    tb, L, dim = h_ref.shape
    da = a_ref.shape[1]

    h = h_ref[...]                                            # (TB, L, dim)

    # First matmul on the MXU with a large M dimension: (TB*L, dim) @ (dim, da).
    h_flat = h.reshape(tb * L, dim)
    proj = jnp.tanh(
        jnp.dot(h_flat, a_ref[...], preferred_element_type=jnp.float32)
    )                                                         # (TB*L, da)

    # Width-1 second "matmul" as a VPU contraction over da -> lane-dense (TB, L).
    proj3 = proj.reshape(tb, L, da)
    logits = jnp.sum(proj3 * b_ref[...], axis=-1)             # (TB, L)

    # Faithful to the PyTorch module: 1e-30 * mask is numerically ~a no-op in
    # f32, but it is kept to preserve the forward semantics exactly.
    logits = logits + jnp.float32(1e-30) * m_ref[...]

    # Softmax over the sequence axis (last / lane axis of the (TB, L) tile).
    mx = jnp.max(logits, axis=-1, keepdims=True)              # (TB, 1)
    e = jnp.exp(logits - mx)                                  # (TB, L)
    denom = jnp.sum(e, axis=-1, keepdims=True)                # (TB, 1)
    inv = pl.reciprocal(denom, approx=True)                   # EUP slot
    attn = e * inv                                            # (TB, L)

    attn_ref[...] = attn.astype(attn_ref.dtype)

    # output[n] = sum_L attention[n, l] * hidden[n, l, :]  -> (TB, dim)
    pooled = jnp.sum(h * attn[:, :, None], axis=1)            # (TB, dim)
    out_ref[...] = pooled.astype(out_ref.dtype)


@functools.partial(jax.jit, static_argnames=("tb",))
def self_attention_batch(hidden, mask, a, b, *, tb=8):
    """hidden: (N, L, dim), mask: (N, L), a: (dim, da), b: (da, 1).

    Returns (output (N, dim), attention (N, L, 1)) — same as the PyTorch module.
    `tb` samples are processed per grid step (use 16-64 for large N; keep the
    resulting grid >= 2 so both v7x TensorCores get work).
    """
    N, L, dim = hidden.shape
    da = a.shape[1]

    hidden = hidden.astype(jnp.float32)
    mask2 = mask.astype(jnp.float32).reshape(N, L)
    a = a.astype(jnp.float32)
    b_row = b.astype(jnp.float32).reshape(1, da)

    # Pad the batch to a multiple of the tile size; padded rows are sliced off.
    n_pad = pl.cdiv(N, tb) * tb
    if n_pad != N:
        hidden = jnp.pad(hidden, ((0, n_pad - N), (0, 0), (0, 0)))
        mask2 = jnp.pad(mask2, ((0, n_pad - N), (0, 0)))

    grid = (n_pad // tb,)

    out, attn = pl.pallas_call(
        _attn_kernel,
        out_shape=(
            jax.ShapeDtypeStruct((n_pad, dim), jnp.float32),
            jax.ShapeDtypeStruct((n_pad, L), jnp.float32),
        ),
        grid_spec=pltpu.PrefetchScalarGridSpec(
            num_scalar_prefetch=0,
            grid=grid,
            in_specs=[
                pl.BlockSpec((tb, L, dim), lambda i: (i, 0, 0)),  # hidden
                pl.BlockSpec((tb, L), lambda i: (i, 0)),          # mask
                pl.BlockSpec((dim, da), lambda i: (0, 0)),        # a (shared)
                pl.BlockSpec((1, da), lambda i: (0, 0)),          # b (shared)
            ],
            out_specs=[
                pl.BlockSpec((tb, dim), lambda i: (i, 0)),        # pooled out
                pl.BlockSpec((tb, L), lambda i: (i, 0)),          # attention
            ],
        ),
        compiler_params=pltpu.CompilerParams(
            dimension_semantics=("parallel",),
            vmem_limit_bytes=32 * 1024 * 1024,   # explicit; fits v7x 64 MiB VMEM
        ),
    )(hidden, mask2, a, b_row)

    out = out[:N]
    attn = attn[:N].reshape(N, L, 1)   # match the PyTorch return layout
    return out, attn


def _xavier_uniform(key, shape, gain):
    fan_in, fan_out = shape[0], shape[1]
    bound = gain * float(np.sqrt(6.0 / (fan_in + fan_out)))
    return jax.random.uniform(key, shape, jnp.float32, minval=-bound, maxval=bound)


if __name__ == "__main__":
    # Small shapes consistent with the module's forward: hidden is (N, L, dim).
    N, L, dim, da = 16, 8, 32, 16
    TB = 8  # -> grid of 2 batch tiles (keeps both v7x TensorCores busy)

    key = jax.random.PRNGKey(0)
    k_h, k_m, k_a, k_b = jax.random.split(key, 4)

    hidden = jax.random.normal(k_h, (N, L, dim), jnp.float32)
    # binary mask, as typically fed to this layer
    mask = (jax.random.uniform(k_m, (N, L)) > 0.5).astype(jnp.float32)

    # Deterministic xavier_uniform init (gain=1.414), matching module __init__.
    a = _xavier_uniform(k_a, (dim, da), gain=1.414)
    b = _xavier_uniform(k_b, (da, 1), gain=1.414)

    out, attn = self_attention_batch(hidden, mask, a, b, tb=TB)
    out = jax.block_until_ready(out)
    attn = jax.block_until_ready(attn)

    # Pure-JAX reference of the PyTorch forward.
    logits_ref = jnp.matmul(jnp.tanh(jnp.matmul(hidden, a)), b)            # (N, L, 1)
    attn_ref = jax.nn.softmax(logits_ref + (1e-30 * mask)[..., None], axis=1)
    out_ref = jnp.matmul(jnp.swapaxes(attn_ref, 1, 2), hidden).squeeze(1)

    # Tolerance covers the EUP approx-reciprocal (~1e-4 relative) in the softmax.
    assert np.allclose(np.asarray(out), np.asarray(out_ref), atol=2e-3, rtol=2e-3)
    assert np.allclose(np.asarray(attn), np.asarray(attn_ref), atol=2e-3, rtol=2e-3)

    print("KERNEL_OK")
</pallas_src>

<mosaic_0001>
module attributes {stable_mosaic.version = 11 : i64} {
  func.func @_attn_kernel(%arg0: i32, %arg1: memref<8x8x32xf32, #tpu.memory_space<vmem>>, %arg2: memref<8x8xf32, #tpu.memory_space<vmem>>, %arg3: memref<32x16xf32, #tpu.memory_space<vmem>>, %arg4: memref<1x16xf32, #tpu.memory_space<vmem>>, %arg5: memref<8x32xf32, #tpu.memory_space<vmem>>, %arg6: memref<8x8xf32, #tpu.memory_space<vmem>>) attributes {dimension_semantics = [#tpu.dimension_semantics<parallel>], iteration_bounds = array<i64: 2>, scalar_prefetch = 0 : i64, scratch_operands = 0 : i64, tpu.core_type = #tpu.core_type<tc>, window_params = [{transform_indices = @transform_0, window_bounds = array<i64: 8, 8, 32>}, {transform_indices = @transform_1, window_bounds = array<i64: 8, 8>}, {pipeline_mode = #tpu.pipeline_mode<synchronous>, transform_indices = @transform_2, window_bounds = array<i64: 32, 16>}, {pipeline_mode = #tpu.pipeline_mode<synchronous>, transform_indices = @transform_3, window_bounds = array<i64: 1, 16>}, {transform_indices = @transform_4, window_bounds = array<i64: 8, 32>}, {transform_indices = @transform_5, window_bounds = array<i64: 8, 8>}]} {
    %c0 = arith.constant 0 : index
    %c0_0 = arith.constant 0 : index
    %c0_1 = arith.constant 0 : index
    %0 = vector.load %arg1[%c0, %c0_0, %c0_1] : memref<8x8x32xf32, #tpu.memory_space<vmem>>, vector<8x8x32xf32>
    %1 = vector.shape_cast %0 : vector<8x8x32xf32> to vector<64x32xf32>
    %c0_2 = arith.constant 0 : index
    %c0_3 = arith.constant 0 : index
    %2 = vector.load %arg3[%c0_2, %c0_3] : memref<32x16xf32, #tpu.memory_space<vmem>>, vector<32x16xf32>
    %cst = arith.constant dense<0.000000e+00> : vector<64x16xf32>
    %3 = tpu.matmul %1, %2, %cst {dimension_numbers = #tpu.dot_dimension_numbers<[1], [0], [0], [1], [0, 0, 1, 1], [], []>} : vector<64x32xf32>, vector<32x16xf32>, vector<64x16xf32> -> vector<64x16xf32>
    %4 = math.tanh %3 : vector<64x16xf32>
    %5 = vector.shape_cast %4 : vector<64x16xf32> to vector<8x8x16xf32>
    %c0_4 = arith.constant 0 : index
    %c0_5 = arith.constant 0 : index
    %6 = vector.load %arg4[%c0_4, %c0_5] : memref<1x16xf32, #tpu.memory_space<vmem>>, vector<1x16xf32>
    %7 = vector.shape_cast %6 : vector<1x16xf32> to vector<1x1x16xf32>
    %8 = vector.broadcast %7 : vector<1x1x16xf32> to vector<8x8x16xf32>
    %9 = arith.mulf %5, %8 : vector<8x8x16xf32>
    %cst_6 = arith.constant dense<0.000000e+00> : vector<8x8xf32>
    %10 = vector.multi_reduction <add>, %9, %cst_6 [2] : vector<8x8x16xf32> to vector<8x8xf32>
    %c0_7 = arith.constant 0 : index
    %c0_8 = arith.constant 0 : index
    %11 = vector.load %arg2[%c0_7, %c0_8] : memref<8x8xf32, #tpu.memory_space<vmem>>, vector<8x8xf32>
    %cst_9 = arith.constant 1.000000e-30 : f32
    %12 = vector.broadcast %cst_9 : f32 to vector<8x8xf32>
    %13 = arith.mulf %12, %11 : vector<8x8xf32>
    %14 = arith.addf %10, %13 : vector<8x8xf32>
    %cst_10 = arith.constant dense<0xFF800000> : vector<8xf32>
    %15 = vector.multi_reduction <maximumf>, %14, %cst_10 [1] : vector<8x8xf32> to vector<8xf32>
    %16 = vector.shape_cast %15 : vector<8xf32> to vector<8x1xf32>
    %17 = vector.broadcast %16 : vector<8x1xf32> to vector<8x8xf32>
    %18 = arith.subf %14, %17 : vector<8x8xf32>
    %19 = math.exp %18 : vector<8x8xf32>
    %cst_11 = arith.constant dense<0.000000e+00> : vector<8xf32>
    %20 = vector.multi_reduction <add>, %19, %cst_11 [1] : vector<8x8xf32> to vector<8xf32>
    %21 = vector.shape_cast %20 : vector<8xf32> to vector<8x1xf32>
    %22 = tpu.reciprocal %21 {approx = true} : vector<8x1xf32> -> vector<8x1xf32>
    %23 = vector.broadcast %22 : vector<8x1xf32> to vector<8x8xf32>
    %24 = arith.mulf %19, %23 : vector<8x8xf32>
    %c0_12 = arith.constant 0 : index
    %c0_13 = arith.constant 0 : index
    %25 = vector.load %arg6[%c0_12, %c0_13] : memref<8x8xf32, #tpu.memory_space<vmem>>, vector<8x8xf32>
    tpu.vector_store %arg6[%c0_12, %c0_13], %24 {strides = array<i32>} : memref<8x8xf32, #tpu.memory_space<vmem>>, vector<8x8xf32>,
    %26 = vector.shape_cast %24 : vector<8x8xf32> to vector<8x8x1xf32>
    %27 = vector.broadcast %26 : vector<8x8x1xf32> to vector<8x8x32xf32>
    %28 = arith.mulf %0, %27 : vector<8x8x32xf32>
    %cst_14 = arith.constant dense<0.000000e+00> : vector<8x32xf32>
    %29 = vector.multi_reduction <add>, %28, %cst_14 [1] : vector<8x8x32xf32> to vector<8x32xf32>
    %c0_15 = arith.constant 0 : index
    %c0_16 = arith.constant 0 : index
    %30 = vector.load %arg5[%c0_15, %c0_16] : memref<8x32xf32, #tpu.memory_space<vmem>>, vector<8x32xf32>
    tpu.vector_store %arg5[%c0_15, %c0_16], %29 {strides = array<i32>} : memref<8x32xf32, #tpu.memory_space<vmem>>, vector<8x32xf32>,
    return
  }
  func.func @transform_0(%arg0: i32) -> (i32, i32, i32) {
    %c0_i32 = arith.constant 0 : i32
    %c0_i32_0 = arith.constant 0 : i32
    %c0_i32_1 = arith.constant 0 : i32
    return %arg0, %c0_i32, %c0_i32_0 : i32, i32, i32
  }
  func.func @transform_1(%arg0: i32) -> (i32, i32) {
    %c0_i32 = arith.constant 0 : i32
    %c0_i32_0 = arith.constant 0 : i32
    return %arg0, %c0_i32 : i32, i32
  }
  func.func @transform_2(%arg0: i32) -> (i32, i32) {
    %c0_i32 = arith.constant 0 : i32
    %c0_i32_0 = arith.constant 0 : i32
    %c0_i32_1 = arith.constant 0 : i32
    return %c0_i32, %c0_i32_0 : i32, i32
  }
  func.func @transform_3(%arg0: i32) -> (i32, i32) {
    %c0_i32 = arith.constant 0 : i32
    %c0_i32_0 = arith.constant 0 : i32
    %c0_i32_1 = arith.constant 0 : i32
    return %c0_i32, %c0_i32_0 : i32, i32
  }
  func.func @transform_4(%arg0: i32) -> (i32, i32) {
    %c0_i32 = arith.constant 0 : i32
    %c0_i32_0 = arith.constant 0 : i32
    return %arg0, %c0_i32 : i32, i32
  }
  func.func @transform_5(%arg0: i32) -> (i32, i32) {
    %c0_i32 = arith.constant 0 : i32
    %c0_i32_0 = arith.constant 0 : i32
    return %arg0, %c0_i32 : i32, i32
  }
}

</mosaic_0001>

<llo_original>
// kernel: self_attention_batch.1
$region0: #{self_attention_batch.1}
  #allocation0 [shape = 'u32[]', space=smem, size = 0x4, offset = 0x4, fixed_abs, tag = 'smem constant byte address 0x4 - core index']
  #allocation1 [shape = 'u32[72,128]{1,0:T(1,128)}', space=vmem, size = 0x9000, scoped, tag = 'internal scratch']
  %s0 = inlined_call_operand.hbm [shape: f32[16,8,32], index: 0, kind: input, shape index: {}]
  %s1 = inlined_call_operand.vmem [shape: f32[16,8], index: 1, kind: input, shape index: {}]
  %s2 = inlined_call_operand.vmem [shape: f32[32,16], index: 2, kind: input, shape index: {}]
  %s3 = inlined_call_operand.vmem [shape: f32[1,16], index: 3, kind: input, shape index: {}]
  %s4 = inlined_call_operand.hbm [shape: f32[16,32], index: 4, kind: output, shape index: {0}]
  %s5 = inlined_call_operand.vmem [shape: f32[16,8], index: 5, kind: output, shape index: {1}]
  %6 = xla_tuple %s4, %s5
  %s7 = sld [smem:[#allocation0]]
  $region61: #{self_attention_batch.1} parent=0
    _
  %s9 = ssub.s32 1, %s7
  %s10 = scalar_select 0, %s9, %s7
  $region1: #{self_attention_batch.1} parent=0
    #allocation2 [shape = 'u8[65536]{0}', space=vmem, size = 0x10000, scoped, tag = 'input window, operand 0']
    #allocation3 [shape = 's32[2]{0}', space=sflag, size = 0x8, scoped, tag = 'scoped memory for self_attention_batch.1']
    #allocation4 [shape = 's32[2]{0}', space=sflag, size = 0x8, scoped, tag = 'scoped memory for self_attention_batch.1']
    #allocation5 [shape = 'u8[8192]{0}', space=vmem, size = 0x2000, scoped, tag = 'output window, operand 0']
    %11 = vsyncpa [#allocation3], 0
    %s12 = scalar_lea.sflag [#allocation3], 1
    %13 = vsyncpa %s12, 0
    %14 = vsyncpa [#allocation4], 0
    %s15 = scalar_lea.sflag [#allocation4], 1
    %16 = vsyncpa %s15, 0
    loop: start=0, step=1, limit=4
    $region2: #{self_attention_batch.1} parent=1 // loop_pre_header
      _
    $region3: #{self_attention_batch.1} parent=1 // loop_header
      %s18 = sphi 0, %s22
      %p19 = scmp.ge.s32.totalorder %s18, 4
      %s28 = sphi 0, %s30
      %s31 = sphi 0, %s28
      %s32 = sphi 0, %s31
      %s48 = sphi 0, %s32
      %s54 = sphi 0, %s56
      %s57 = sphi 0, %s54
      %s58 = sphi 0, %s57
      %s74 = sphi 0, %s58
      %s78 = sphi 0, %s78
      %s80 = sphi 0, %s78
      %s81 = sphi 0, %s80
      %s95 = sphi 0, %s81
      %s99 = sphi 0, %s99
      %s101 = sphi 0, %s99
      %s102 = sphi 0, %s101
      %s116 = sphi 0, %s102
      %s122 = sphi 0, %s124
      %s125 = sphi 0, %s122
      %s126 = sphi 0, %s125
      %s142 = sphi 0, %s126
      %s148 = sphi 0, %s150
      %s151 = sphi 0, %s148
      %s152 = sphi 0, %s151
      %s168 = sphi 0, %s152
    $region4: #{self_attention_batch.1} parent=1 // loop_header_branch
      %21 = sbr.rel (%p19) target = $region8
    $region5: #{self_attention_batch.1} parent=1 // loop_body
      %s23 = ssub.s32 %s18, 1
      %s24 = ssub.s32 %s18, 2
      %s25 = sadd.s32 %s18, 1
      %s26 = ssub.s32 %s18, %s25
      %p27 = scmp.eq.s32.totalorder %s26, 0
      %s29 = sadd.s32 %s28, 1
      %s30 = scalar_select %p27, %s28, %s29
      %p33 = pneg %p27
      %p34 = scmp.eq.s32.totalorder %s18, 1
      %p35 = por %p33, %p34
      %p36 = scmp.ne.s32.totalorder %s28, %s31
      %p37 = scmp.eq.s32.totalorder %s18, 0
      %p38 = por %p36, %p37
      %p39 = scmp.ne.s32.totalorder %s28, %s31
      %p40 = scmp.eq.s32.totalorder %s23, 1
      %p41 = por %p39, %p40
      %p42 = scmp.ne.s32.totalorder %s31, %s32
      %p43 = scmp.eq.s32.totalorder %s23, 0
      %p44 = por %p42, %p43
      %p45 = scmp.ne.s32.totalorder %s31, %s32
      %p46 = scmp.eq.s32.totalorder %s24, 1
      %p47 = por %p45, %p46
      %p49 = scmp.ne.s32.totalorder %s32, %s48
      %p50 = scmp.eq.s32.totalorder %s24, 0
      %p51 = por %p49, %p50
      %s52 = ssub.s32 %s18, %s25
      %p53 = scmp.eq.s32.totalorder %s52, 0
      %s55 = sadd.s32 %s54, 1
      %s56 = scalar_select %p53, %s54, %s55
      %p59 = pneg %p53
      %p60 = scmp.eq.s32.totalorder %s18, 1
      %p61 = por %p59, %p60
      %p62 = scmp.ne.s32.totalorder %s54, %s57
      %p63 = scmp.eq.s32.totalorder %s18, 0
      %p64 = por %p62, %p63
      %p65 = scmp.ne.s32.totalorder %s54, %s57
      %p66 = scmp.eq.s32.totalorder %s23, 1
      %p67 = por %p65, %p66
      %p68 = scmp.ne.s32.totalorder %s57, %s58
      %p69 = scmp.eq.s32.totalorder %s23, 0
      %p70 = por %p68, %p69
      %p71 = scmp.ne.s32.totalorder %s57, %s58
      %p72 = scmp.eq.s32.totalorder %s24, 1
      %p73 = por %p71, %p72
      %p75 = scmp.ne.s32.totalorder %s58, %s74
      %p76 = scmp.eq.s32.totalorder %s24, 0
      %p77 = por %p75, %p76
      %s79 = sadd.s32 %s78, 1
      %p82 = scmp.eq.s32.totalorder %s18, 1
      %p83 = scmp.ne.s32.totalorder %s78, %s80
      %p84 = scmp.eq.s32.totalorder %s18, 0
      %p85 = por %p83, %p84
      %p86 = scmp.ne.s32.totalorder %s78, %s80
      %p87 = scmp.eq.s32.totalorder %s23, 1
      %p88 = por %p86, %p87
      %p89 = scmp.ne.s32.totalorder %s80, %s81
      %p90 = scmp.eq.s32.totalorder %s23, 0
      %p91 = por %p89, %p90
      %p92 = scmp.ne.s32.totalorder %s80, %s81
      %p93 = scmp.eq.s32.totalorder %s24, 1
      %p94 = por %p92, %p93
      %p96 = scmp.ne.s32.totalorder %s81, %s95
      %p97 = scmp.eq.s32.totalorder %s24, 0
      %p98 = por %p96, %p97
      %s100 = sadd.s32 %s99, 1
      %p103 = scmp.eq.s32.totalorder %s18, 1
      %p104 = scmp.ne.s32.totalorder %s99, %s101
      %p105 = scmp.eq.s32.totalorder %s18, 0
      %p106 = por %p104, %p105
      %p107 = scmp.ne.s32.totalorder %s99, %s101
      %p108 = scmp.eq.s32.totalorder %s23, 1
      %p109 = por %p107, %p108
      %p110 = scmp.ne.s32.totalorder %s101, %s102
      %p111 = scmp.eq.s32.totalorder %s23, 0
      %p112 = por %p110, %p111
      %p113 = scmp.ne.s32.totalorder %s101, %s102
      %p114 = scmp.eq.s32.totalorder %s24, 1
      %p115 = por %p113, %p114
      %p117 = scmp.ne.s32.totalorder %s102, %s116
      %p118 = scmp.eq.s32.totalorder %s24, 0
      %p119 = por %p117, %p118
      %s120 = ssub.s32 %s18, %s25
      %p121 = scmp.eq.s32.totalorder %s120, 0
      %s123 = sadd.s32 %s122, 1
      %s124 = scalar_select %p121, %s122, %s123
      %p127 = pneg %p121
      %p128 = scmp.eq.s32.totalorder %s18, 1
      %p129 = por %p127, %p128
      %p130 = scmp.ne.s32.totalorder %s122, %s125
      %p131 = scmp.eq.s32.totalorder %s18, 0
      %p132 = por %p130, %p131
      %p133 = scmp.ne.s32.totalorder %s122, %s125
      %p134 = scmp.eq.s32.totalorder %s23, 1
      %p135 = por %p133, %p134
      %p136 = scmp.ne.s32.totalorder %s125, %s126
      %p137 = scmp.eq.s32.totalorder %s23, 0
      %p138 = por %p136, %p137
      %p139 = scmp.ne.s32.totalorder %s125, %s126
      %p140 = scmp.eq.s32.totalorder %s24, 1
      %p141 = por %p139, %p140
      %p143 = scmp.ne.s32.totalorder %s126, %s142
      %p144 = scmp.eq.s32.totalorder %s24, 0
      %p145 = por %p143, %p144
      %s146 = ssub.s32 %s18, %s25
      %p147 = scmp.eq.s32.totalorder %s146, 0
      %s149 = sadd.s32 %s148, 1
      %s150 = scalar_select %p147, %s148, %s149
      %p153 = pneg %p147
      %p154 = scmp.eq.s32.totalorder %s18, 1
      %p155 = por %p153, %p154
      %p156 = scmp.ne.s32.totalorder %s148, %s151
      %p157 = scmp.eq.s32.totalorder %s18, 0
      %p158 = por %p156, %p157
      %p159 = scmp.ne.s32.totalorder %s148, %s151
      %p160 = scmp.eq.s32.totalorder %s23, 1
      %p161 = por %p159, %p160
      %p162 = scmp.ne.s32.totalorder %s151, %s152
      %p163 = scmp.eq.s32.totalorder %s23, 0
      %p164 = por %p162, %p163
      %p165 = scmp.ne.s32.totalorder %s151, %s152
      %p166 = scmp.eq.s32.totalorder %s24, 1
      %p167 = por %p165, %p166
      %p169 = scmp.ne.s32.totalorder %s152, %s168
      %p170 = scmp.eq.s32.totalorder %s24, 0
      %p171 = por %p169, %p170
      %p172 = scmp.le.s32.totalorder 1, %s18
      %p173 = scmp.lt.s32.totalorder %s18, 3
      %p174 = pnand %p172, %p173
      %p175 = pneg %p174
      // Predicated region
      $region9: #{self_attention_batch.1} parent=5 // pred_check
        _
      $region10: #{self_attention_batch.1} parent=5 // pred_check_branch
        %177 = sbr.rel (%p174) target = $region12
      $region11: #{self_attention_batch.1} parent=5 // pred_region
        %s178 = ssub.s32 %s18, 1
        // Predicated region
        $region13: #{self_attention_batch.1} parent=11 // pred_check
          %p179 = pneg %p91
        $region14: #{self_attention_batch.1} parent=11 // pred_check_branch
          %181 = sbr.rel (%p179) target = $region16
        $region15: #{self_attention_batch.1} parent=11 // pred_region
          _
        $region16: #{self_attention_batch.1} parent=11 // pred_fallthru
          _
        // Predicated region
        $region17: #{self_attention_batch.1} parent=11 // pred_check
          %p182 = pneg %p112
        $region18: #{self_attention_batch.1} parent=11 // pred_check_branch
          %184 = sbr.rel (%p182) target = $region20
        $region19: #{self_attention_batch.1} parent=11 // pred_region
          _
        $region20: #{self_attention_batch.1} parent=11 // pred_fallthru
          _
      $region12: #{self_attention_batch.1} parent=5 // pred_fallthru
        _
      %p185 = scmp.lt.s32.totalorder %s18, 2
      // Predicated region
      $region21: #{self_attention_batch.1} parent=5 // pred_check
        %p186 = pneg %p185
      $region22: #{self_attention_batch.1} parent=5 // pred_check_branch
        %188 = sbr.rel (%p186) target = $region24
      $region23: #{self_attention_batch.1} parent=5 // pred_region
        // Predicated region
        $region25: #{self_attention_batch.1} parent=23 // pred_check
          %p189 = pneg %p38
        $region26: #{self_attention_batch.1} parent=23 // pred_check_branch
          %191 = sbr.rel (%p189) target = $region28
        $region27: #{self_attention_batch.1} parent=23 // pred_region
          %s192 = sand.u32 %s28, 1
          %s193 = scalar_lea.sflag [#allocation3], %s192
          %s194 = sand.u32 %s28, 1
          %s195 = smul.addr %s194, 64
          %s196 = scalar_lea.vmem [#allocation2], %s195
          %s197 = smul.u32 8, %s18
          %199 = vsyncadd %s193, 0
          %s200 = smul.addr %s197, 8
          %s201 = scalar_lea.hbm %s0, %s200
          %s202 = sshll.u32 %s201, 4
          %s203 = int_to_ptr.hbm [resolvable:$true] %s202
          %s204 = sshll.u32 %s196, 4
          %s205 = int_to_ptr.vmem [resolvable:$true] %s204
          %210 = dma.hbm_to_vmem [thread:$0]  %s203, 1024, %s205, %s193, 128, 128, 8
        $region28: #{self_attention_batch.1} parent=23 // pred_fallthru
          _
        // Predicated region
        $region29: #{self_attention_batch.1} parent=23 // pred_check
          %p211 = pneg %p64
        $region30: #{self_attention_batch.1} parent=23 // pred_check_branch
          %213 = sbr.rel (%p211) target = $region32
        $region31: #{self_attention_batch.1} parent=23 // pred_region
          %p214 = scmp.lt.s32.totalorder %s18, 1
          %s215 = scalar_select %p214, %s18, 1
          %s216 = smul.addr %s215, 8
          %s217 = scalar_lea.vmem %s1, %s216
        $region32: #{self_attention_batch.1} parent=23 // pred_fallthru
          _
      $region24: #{self_attention_batch.1} parent=5 // pred_fallthru
        _
      %p218 = scmp.le.s32.totalorder 1, %s18
      %p219 = scmp.lt.s32.totalorder %s18, 3
      %p220 = pnand %p218, %p219
      %p221 = pneg %p220
      // Predicated region
      $region33: #{self_attention_batch.1} parent=5 // pred_check
        _
      $region34: #{self_attention_batch.1} parent=5 // pred_check_branch
        %223 = sbr.rel (%p220) target = $region36
      $region35: #{self_attention_batch.1} parent=5 // pred_region
        %s224 = ssub.s32 %s18, 1
        %s225 = sand.u32 %s31, 1
        %s226 = scalar_lea.sflag [#allocation3], %s225
        %s227 = sand.u32 %s31, 1
        %s228 = smul.addr %s227, 64
        %s229 = scalar_lea.vmem [#allocation2], %s228
        // Predicated region
        $region37: #{self_attention_batch.1} parent=35 // pred_check
          %p230 = pneg %p44
        $region38: #{self_attention_batch.1} parent=35 // pred_check_branch
          %232 = sbr.rel (%p230) target = $region40
        $region39: #{self_attention_batch.1} parent=35 // pred_region
          %234 = dma.done %s226, 1024
        $region40: #{self_attention_batch.1} parent=35 // pred_fallthru
          _
        %s235 = sand.u32 %s31, 1
        %s236 = scalar_lea.sflag [#allocation3], %s235
        %s237 = sand.u32 %s31, 1
        %s238 = smul.addr %s237, 64
        %s239 = scalar_lea.vmem [#allocation2], %s238
        %p240 = pneg %p44
        %p241 = pneg %p41
        %p242 = scmp.lt.s32.totalorder %s23, 1
        %s243 = scalar_select %p242, %s23, 1
        %s244 = smul.addr %s243, 8
        %s245 = scalar_lea.vmem %s1, %s244
        %p246 = pneg %p70
        %p247 = pneg %p67
        %p248 = pneg %p91
        %p249 = pneg %p88
        %p250 = pneg %p112
        %p251 = pneg %p109
        %p252 = pneg %p138
        %p253 = pneg %p135
        %s254 = sand.u32 %s125, 1
        %s255 = scalar_lea.sflag [#allocation4], %s254
        %s256 = sand.u32 %s125, 1
        %s257 = smul.addr %s256, 8
        %s258 = scalar_lea.vmem [#allocation5], %s257
        %p259 = pneg %p164
        %p260 = pneg %p161
        %p261 = scmp.lt.s32.totalorder %s23, 1
        %s262 = scalar_select %p261, %s23, 1
        %s263 = smul.addr %s262, 8
        %s264 = scalar_lea.vmem %s5, %s263
        %s265 = smul.u32 8, %s23
        %p266 = scmp.lt.s32.totalorder %s23, 1
        %s267 = scalar_select %p266, %s23, 1
        %s268 = smul.addr %s267, 8
        %s269 = scalar_lea.vmem %s1, %s268
        %p270 = scmp.lt.s32.totalorder %s23, 1
        %s271 = scalar_select %p270, %s23, 1
        %s272 = smul.addr %s271, 8
        %s273 = scalar_lea.vmem %s5, %s272
        %v274 = vld [vmem:[%s229] sm:$0xff]
        %v275 = vld [vmem:[%s229 + $0x8] sm:$0xff]
        %v276 = vld [vmem:[%s229 + $0x10] sm:$0xff]
        %v277 = vld [vmem:[%s229 + $0x18] sm:$0xff]
        %v278 = vld [vmem:[%s229 + $0x20] sm:$0xff]
        %v279 = vld [vmem:[%s229 + $0x28] sm:$0xff]
        %v280 = vld [vmem:[%s229 + $0x30] sm:$0xff]
        %v281 = vld [vmem:[%s229 + $0x38] sm:$0xff]
        %v282 = vld [vmem:[%s2] sm:$0xff]
        %v283 = vld [vmem:[%s2 + $0x8] sm:$0xff]
        %v284 = vld [vmem:[%s2 + $0x10] sm:$0xff]
        %v285 = vld [vmem:[%s2 + $0x18] sm:$0xff]
        %vm286 = vcmask 261120
        %v288 = vsel %vm286, %v274, 0
        %v291 = vsel %vm286, %v275, 0
        %v294 = vsel %vm286, %v276, 0
        %v297 = vsel %vm286, %v277, 0
        %v300 = vsel %vm286, %v278, 0
        %v303 = vsel %vm286, %v279, 0
        %v306 = vsel %vm286, %v280, 0
        %v309 = vsel %vm286, %v281, 0
        %311 = vmatpush.msra.mxu0 0.0
        %312 = vmatpush.msra.mxu0 0.0
        %313 = vmatpush.msra.mxu0 0.0
        %314 = vmatpush.msra.mxu0 0.0
        %315 = vmatpush.msra.mxu0 0.0
        %316 = vmatpush.msra.mxu0 0.0
        %317 = vmatpush.msra.mxu0 0.0
        %318 = vmatpush.msra.mxu0 0.0
        %319 = vmatpush.msra.mxu0 0.0
        %320 = vmatpush.msra.mxu0 0.0
        %321 = vmatpush.msra.mxu0 0.0
        %322 = vmatpush.msra.mxu0 0.0
        %323 = vmatpush.msra.mxu0 %v285
        %324 = vmatpush.msra.mxu0 %v284
        %325 = vmatpush.msra.mxu0 %v283
        %326 = vmatpush.msra.mxu0 %v282
        %327 = vmatmul.f32.gmra.mxu0 %v288
        %v328 = vpop.f32.mrf.mxu0
        %v329 = vadd.f32 0.0, %v328
        %330 = vmatmul.f32.gmra.mxu0 %v291
        %v331 = vpop.f32.mrf.mxu0
        %v332 = vadd.f32 0.0, %v331
        %333 = vmatmul.f32.gmra.mxu0 %v294
        %v334 = vpop.f32.mrf.mxu0
        %v335 = vadd.f32 0.0, %v334
        %336 = vmatmul.f32.gmra.mxu0 %v297
        %v337 = vpop.f32.mrf.mxu0
        %v338 = vadd.f32 0.0, %v337
        %339 = vmatmul.f32.gmra.mxu0 %v300
        %v340 = vpop.f32.mrf.mxu0
        %v341 = vadd.f32 0.0, %v340
        %342 = vmatmul.f32.gmra.mxu0 %v303
        %v343 = vpop.f32.mrf.mxu0
        %v344 = vadd.f32 0.0, %v343
        %345 = vmatmul.f32.gmra.mxu0 %v306
        %v346 = vpop.f32.mrf.mxu0
        %v347 = vadd.f32 0.0, %v346
        %348 = vmatmul.f32.gmra.mxu0 %v309
        %v349 = vpop.f32.mrf.mxu0
        %v350 = vadd.f32 0.0, %v349
        %351 = vdwg.mxu0
        %v352 = vtanh.pop %v329
        %v353 = vtanh.pop %v332
        %v354 = vtanh.pop %v335
        %v355 = vtanh.pop %v338
        %v356 = vtanh.pop %v341
        %v357 = vtanh.pop %v344
        %v358 = vtanh.pop %v347
        %v359 = vtanh.pop %v350
        %v360 = vld [vmem:[%s3] sm:$0x1]
        %v362 = vperm.slane %v360, 0
        %v364 = vmul.f32 %v352, %v362
        %v365 = vmul.f32 %v353, %v362
        %v366 = vmul.f32 %v354, %v362
        %v367 = vmul.f32 %v355, %v362
        %v368 = vmul.f32 %v356, %v362
        %v369 = vmul.f32 %v357, %v362
        %v370 = vmul.f32 %v358, %v362
        %v371 = vmul.f32 %v359, %v362
        %vm372 = vcmask 130048
        %v373 = vsel %vm372, %v364, 0.0
        %374 = vadd.xlane.f32.xlu0 %v373
        %v375 = vpop.xlane.xlu0 %374
        %v376 = vsel %vm372, %v365, 0.0
        %377 = vadd.xlane.f32.xlu0 %v376
        %v378 = vpop.xlane.xlu0 %377
        %v379 = vsel %vm372, %v366, 0.0
        %380 = vadd.xlane.f32.xlu0 %v379
        %v381 = vpop.xlane.xlu0 %380
        %v382 = vsel %vm372, %v367, 0.0
        %383 = vadd.xlane.f32.xlu0 %v382
        %v384 = vpop.xlane.xlu0 %383
        %v385 = vsel %vm372, %v368, 0.0
        %386 = vadd.xlane.f32.xlu0 %v385
        %v387 = vpop.xlane.xlu0 %386
        %v388 = vsel %vm372, %v369, 0.0
        %389 = vadd.xlane.f32.xlu0 %v388
        %v390 = vpop.xlane.xlu0 %389
        %v391 = vsel %vm372, %v370, 0.0
        %392 = vadd.xlane.f32.xlu0 %v391
        %v393 = vpop.xlane.xlu0 %392
        %v394 = vsel %vm372, %v371, 0.0
        %395 = vadd.xlane.f32.xlu0 %v394
        %v396 = vpop.xlane.xlu0 %395
        %v397 = vld [vmem:[%s269] sm:$0xff]
        %v398 = vmul.f32 %v397, 1e-30
        %v400 = vperm.slane %v398, 0
        %v401 = vlaneseq
        %v402 = vshrl.u32 %v401, 7
        %404 = vset.pattern.permute.xlu0 %v402
        %405 = vperm.xlu0 %404, %v400
        %v406 = vpop.permute.xlu0 %405
        %v407 = vperm.slane %v398, 1
        %v408 = vlaneseq
        %v409 = vshrl.u32 %v408, 7
        %411 = vset.pattern.permute.xlu0 %v409
        %412 = vperm.xlu0 %411, %v407
        %v413 = vpop.permute.xlu0 %412
        %v414 = vperm.slane %v398, 2
        %v415 = vlaneseq
        %v416 = vshrl.u32 %v415, 7
        %418 = vset.pattern.permute.xlu0 %v416
        %419 = vperm.xlu0 %418, %v414
        %v420 = vpop.permute.xlu0 %419
        %v421 = vperm.slane %v398, 3
        %v422 = vlaneseq
        %v423 = vshrl.u32 %v422, 7
        %425 = vset.pattern.permute.xlu0 %v423
        %426 = vperm.xlu0 %425, %v421
        %v427 = vpop.permute.xlu0 %426
        %v428 = vperm.slane %v398, 4
        %v429 = vlaneseq
        %v430 = vshrl.u32 %v429, 7
        %432 = vset.pattern.permute.xlu0 %v430
        %433 = vperm.xlu0 %432, %v428
        %v434 = vpop.permute.xlu0 %433
        %v435 = vperm.slane %v398, 5
        %v436 = vlaneseq
        %v437 = vshrl.u32 %v436, 7
        %439 = vset.pattern.permute.xlu0 %v437
        %440 = vperm.xlu0 %439, %v435
        %v441 = vpop.permute.xlu0 %440
        %v442 = vperm.slane %v398, 6
        %v443 = vlaneseq
        %v444 = vshrl.u32 %v443, 7
        %446 = vset.pattern.permute.xlu0 %v444
        %447 = vperm.xlu0 %446, %v442
        %v448 = vpop.permute.xlu0 %447
        %v449 = vperm.slane %v398, 7
        %v450 = vlaneseq
        %v451 = vshrl.u32 %v450, 7
        %453 = vset.pattern.permute.xlu0 %v451
        %454 = vperm.xlu0 %453, %v449
        %v455 = vpop.permute.xlu0 %454
        %v464 = vadd.f32 %v375, %v406
        %v465 = vadd.f32 %v378, %v413
        %v466 = vadd.f32 %v381, %v420
        %v467 = vadd.f32 %v384, %v427
        %v468 = vadd.f32 %v387, %v434
        %v469 = vadd.f32 %v390, %v441
        %v470 = vadd.f32 %v393, %v448
        %v471 = vadd.f32 %v396, %v455
        %480 = vset.pattern.permute.xlu0 0
        %481 = vperm.xlu0 %480, %v464
        %v482 = vpop.permute.xlu0 %481
        %483 = vset.pattern.permute.xlu0 0
        %484 = vperm.xlu0 %483, %v465
        %v485 = vpop.permute.xlu0 %484
        %486 = vset.pattern.permute.xlu0 0
        %487 = vperm.xlu0 %486, %v466
        %v488 = vpop.permute.xlu0 %487
        %489 = vset.pattern.permute.xlu0 0
        %490 = vperm.xlu0 %489, %v467
        %v491 = vpop.permute.xlu0 %490
        %492 = vset.pattern.permute.xlu0 0
        %493 = vperm.xlu0 %492, %v468
        %v494 = vpop.permute.xlu0 %493
        %495 = vset.pattern.permute.xlu0 0
        %496 = vperm.xlu0 %495, %v469
        %v497 = vpop.permute.xlu0 %496
        %498 = vset.pattern.permute.xlu0 0
        %499 = vperm.xlu0 %498, %v470
        %v500 = vpop.permute.xlu0 %499
        %501 = vset.pattern.permute.xlu0 0
        %502 = vperm.xlu0 %501, %v471
        %v503 = vpop.permute.xlu0 %502
        %v504 = vlaneseq
        %v505 = vand.u32 %v504, 127
        %v506 = vperm.slane %v482, %v505
        %v507 = vperm.slane %v485, %v505
        %v508 = vperm.slane %v488, %v505
        %v509 = vperm.slane %v491, %v505
        %v510 = vperm.slane %v494, %v505
        %v511 = vperm.slane %v497, %v505
        %v512 = vperm.slane %v500, %v505
        %v513 = vperm.slane %v503, %v505
        %vm514 = vcmask 1041409
        %v515 = vsel %vm514, %v507, %v506
        %vm516 = vcmask 1042434
        %v517 = vsel %vm516, %v508, %v515
        %vm518 = vcmask 1043459
        %v519 = vsel %vm518, %v509, %v517
        %vm520 = vcmask 1044484
        %v521 = vsel %vm520, %v510, %v519
        %vm522 = vcmask 1045509
        %v523 = vsel %vm522, %v511, %v521
        %vm524 = vcmask 1046534
        %v525 = vsel %vm524, %v512, %v523
        %vm526 = vcmask 1047559
        %v527 = vsel %vm526, %v513, %v525
        %vm529 = vcmask 64512
        %v530 = vsel %vm529, %v527, -inf
        %531 = vmax.xlane.f32.xlu0 %v530
        %v532 = vpop.xlane.xlu0 %531
        %v534 = vperm.slane %v532, 0
        %v535 = vperm.slane %v532, 1
        %v536 = vperm.slane %v532, 2
        %v537 = vperm.slane %v532, 3
        %v538 = vperm.slane %v532, 4
        %v539 = vperm.slane %v532, 5
        %v540 = vperm.slane %v532, 6
        %v541 = vperm.slane %v532, 7
        %v550 = vsub.f32 %v464, %v534
        %v551 = vsub.f32 %v465, %v535
        %v552 = vsub.f32 %v466, %v536
        %v553 = vsub.f32 %v467, %v537
        %v554 = vsub.f32 %v468, %v538
        %v555 = vsub.f32 %v469, %v539
        %v556 = vsub.f32 %v470, %v540
        %v557 = vsub.f32 %v471, %v541
        %v558 = vmul.f32 %v550, 1.442695
        %v559 = vpow.pop %v558
        %v560 = vmul.f32 %v551, 1.442695
        %v561 = vpow.pop %v560
        %v562 = vmul.f32 %v552, 1.442695
        %v563 = vpow.pop %v562
        %v564 = vmul.f32 %v553, 1.442695
        %v565 = vpow.pop %v564
        %v566 = vmul.f32 %v554, 1.442695
        %v567 = vpow.pop %v566
        %v568 = vmul.f32 %v555, 1.442695
        %v569 = vpow.pop %v568
        %v570 = vmul.f32 %v556, 1.442695
        %v571 = vpow.pop %v570
        %v572 = vmul.f32 %v557, 1.442695
        %v573 = vpow.pop %v572
        %582 = vset.pattern.permute.xlu0 0
        %583 = vperm.xlu0 %582, %v559
        %v584 = vpop.permute.xlu0 %583
        %585 = vset.pattern.permute.xlu0 0
        %586 = vperm.xlu0 %585, %v561
        %v587 = vpop.permute.xlu0 %586
        %588 = vset.pattern.permute.xlu0 0
        %589 = vperm.xlu0 %588, %v563
        %v590 = vpop.permute.xlu0 %589
        %591 = vset.pattern.permute.xlu0 0
        %592 = vperm.xlu0 %591, %v565
        %v593 = vpop.permute.xlu0 %592
        %594 = vset.pattern.permute.xlu0 0
        %595 = vperm.xlu0 %594, %v567
        %v596 = vpop.permute.xlu0 %595
        %597 = vset.pattern.permute.xlu0 0
        %598 = vperm.xlu0 %597, %v569
        %v599 = vpop.permute.xlu0 %598
        %600 = vset.pattern.permute.xlu0 0
        %601 = vperm.xlu0 %600, %v571
        %v602 = vpop.permute.xlu0 %601
        %603 = vset.pattern.permute.xlu0 0
        %604 = vperm.xlu0 %603, %v573
        %v605 = vpop.permute.xlu0 %604
        %v606 = vperm.slane %v584, %v505
        %v607 = vperm.slane %v587, %v505
        %v608 = vperm.slane %v590, %v505
        %v609 = vperm.slane %v593, %v505
        %v610 = vperm.slane %v596, %v505
        %v611 = vperm.slane %v599, %v505
        %v612 = vperm.slane %v602, %v505
        %v613 = vperm.slane %v605, %v505
        %v614 = vsel %vm514, %v607, %v606
        %v615 = vsel %vm516, %v608, %v614
        %v616 = vsel %vm518, %v609, %v615
        %v617 = vsel %vm520, %v610, %v616
        %v618 = vsel %vm522, %v611, %v617
        %v619 = vsel %vm524, %v612, %v618
        %v620 = vsel %vm526, %v613, %v619
        %v622 = vsel %vm529, %v620, 0.0
        %623 = vadd.xlane.f32.xlu0 %v622
        %v624 = vpop.xlane.xlu0 %623
        %v625 = vrcp.pop %v624
        %v627 = vperm.slane %v625, 0
        %v628 = vperm.slane %v625, 1
        %v629 = vperm.slane %v625, 2
        %v630 = vperm.slane %v625, 3
        %v631 = vperm.slane %v625, 4
        %v632 = vperm.slane %v625, 5
        %v633 = vperm.slane %v625, 6
        %v634 = vperm.slane %v625, 7
        %v643 = vmul.f32 %v559, %v627
        %v644 = vmul.f32 %v561, %v628
        %v645 = vmul.f32 %v563, %v629
        %v646 = vmul.f32 %v565, %v630
        %v647 = vmul.f32 %v567, %v631
        %v648 = vmul.f32 %v569, %v632
        %v649 = vmul.f32 %v571, %v633
        %v650 = vmul.f32 %v573, %v634
        %659 = vset.pattern.permute.xlu0 0
        %660 = vperm.xlu0 %659, %v643
        %v661 = vpop.permute.xlu0 %660
        %662 = vset.pattern.permute.xlu0 0
        %663 = vperm.xlu0 %662, %v644
        %v664 = vpop.permute.xlu0 %663
        %665 = vset.pattern.permute.xlu0 0
        %666 = vperm.xlu0 %665, %v645
        %v667 = vpop.permute.xlu0 %666
        %668 = vset.pattern.permute.xlu0 0
        %669 = vperm.xlu0 %668, %v646
        %v670 = vpop.permute.xlu0 %669
        %671 = vset.pattern.permute.xlu0 0
        %672 = vperm.xlu0 %671, %v647
        %v673 = vpop.permute.xlu0 %672
        %674 = vset.pattern.permute.xlu0 0
        %675 = vperm.xlu0 %674, %v648
        %v676 = vpop.permute.xlu0 %675
        %677 = vset.pattern.permute.xlu0 0
        %678 = vperm.xlu0 %677, %v649
        %v679 = vpop.permute.xlu0 %678
        %680 = vset.pattern.permute.xlu0 0
        %681 = vperm.xlu0 %680, %v650
        %v682 = vpop.permute.xlu0 %681
        %v683 = vperm.slane %v661, %v505
        %v684 = vperm.slane %v664, %v505
        %v685 = vperm.slane %v667, %v505
        %v686 = vperm.slane %v670, %v505
        %v687 = vperm.slane %v673, %v505
        %v688 = vperm.slane %v676, %v505
        %v689 = vperm.slane %v679, %v505
        %v690 = vperm.slane %v682, %v505
        %v691 = vsel %vm514, %v684, %v683
        %v692 = vsel %vm516, %v685, %v691
        %v693 = vsel %vm518, %v686, %v692
        %v694 = vsel %vm520, %v687, %v693
        %v695 = vsel %vm522, %v688, %v694
        %v696 = vsel %vm524, %v689, %v695
        %v697 = vsel %vm526, %v690, %v696
        %699 = vst.msk [vmem:[%s273] sm:$0xff] %vm529, %v697
        %v708 = vmul.f32 %v274, %v661
        %v709 = vmul.f32 %v275, %v664
        %v710 = vmul.f32 %v276, %v667
        %v711 = vmul.f32 %v277, %v670
        %v712 = vmul.f32 %v278, %v673
        %v713 = vmul.f32 %v279, %v676
        %v714 = vmul.f32 %v280, %v679
        %v715 = vmul.f32 %v281, %v682
        %v716 = vsel %vm286, %v708, 0.0
        %v717 = vrot.slane %v716, 4
        %v718 = vadd.f32 %v716, %v717
        %v719 = vrot.slane %v718, 2
        %v720 = vadd.f32 %v718, %v719
        %v721 = vrot.slane %v720, 1
        %v722 = vadd.f32 %v720, %v721
        %v723 = vsel %vm286, %v709, 0.0
        %v724 = vrot.slane %v723, 4
        %v725 = vadd.f32 %v723, %v724
        %v726 = vrot.slane %v725, 2
        %v727 = vadd.f32 %v725, %v726
        %v728 = vrot.slane %v727, 1
        %v729 = vadd.f32 %v727, %v728
        %v730 = vsel %vm286, %v710, 0.0
        %v731 = vrot.slane %v730, 4
        %v732 = vadd.f32 %v730, %v731
        %v733 = vrot.slane %v732, 2
        %v734 = vadd.f32 %v732, %v733
        %v735 = vrot.slane %v734, 1
        %v736 = vadd.f32 %v734, %v735
        %v737 = vsel %vm286, %v711, 0.0
        %v738 = vrot.slane %v737, 4
        %v739 = vadd.f32 %v737, %v738
        %v740 = vrot.slane %v739, 2
        %v741 = vadd.f32 %v739, %v740
        %v742 = vrot.slane %v741, 1
        %v743 = vadd.f32 %v741, %v742
        %v744 = vsel %vm286, %v712, 0.0
        %v745 = vrot.slane %v744, 4
        %v746 = vadd.f32 %v744, %v745
        %v747 = vrot.slane %v746, 2
        %v748 = vadd.f32 %v746, %v747
        %v749 = vrot.slane %v748, 1
        %v750 = vadd.f32 %v748, %v749
        %v751 = vsel %vm286, %v713, 0.0
        %v752 = vrot.slane %v751, 4
        %v753 = vadd.f32 %v751, %v752
        %v754 = vrot.slane %v753, 2
        %v755 = vadd.f32 %v753, %v754
        %v756 = vrot.slane %v755, 1
        %v757 = vadd.f32 %v755, %v756
        %v758 = vsel %vm286, %v714, 0.0
        %v759 = vrot.slane %v758, 4
        %v760 = vadd.f32 %v758, %v759
        %v761 = vrot.slane %v760, 2
        %v762 = vadd.f32 %v760, %v761
        %v763 = vrot.slane %v762, 1
        %v764 = vadd.f32 %v762, %v763
        %v765 = vsel %vm286, %v715, 0.0
        %v766 = vrot.slane %v765, 4
        %v767 = vadd.f32 %v765, %v766
        %v768 = vrot.slane %v767, 2
        %v769 = vadd.f32 %v767, %v768
        %v770 = vrot.slane %v769, 1
        %v771 = vadd.f32 %v769, %v770
        %v780 = vsel %vm514, %v729, %v722
        %v781 = vsel %vm516, %v736, %v780
        %v782 = vsel %vm518, %v743, %v781
        %v783 = vsel %vm520, %v750, %v782
        %v784 = vsel %vm522, %v757, %v783
        %v785 = vsel %vm524, %v764, %v784
        %v786 = vsel %vm526, %v771, %v785
        %788 = vst.msk [vmem:[%s258] sm:$0xff] %vm286, %v786
        %s789 = sand.u32 %s125, 1
        %s790 = scalar_lea.sflag [#allocation4], %s789
        %s791 = sand.u32 %s125, 1
        %s792 = smul.addr %s791, 8
        %s793 = scalar_lea.vmem [#allocation5], %s792
        %p794 = scmp.lt.s32.totalorder %s23, 1
        %s795 = scalar_select %p794, %s23, 1
        %s796 = smul.addr %s795, 8
        %s797 = scalar_lea.vmem %s5, %s796
        // Predicated region
        $region41: #{self_attention_batch.1} parent=35 // pred_check
          %p798 = pneg %p135
        $region42: #{self_attention_batch.1} parent=35 // pred_check_branch
          %800 = sbr.rel (%p798) target = $region44
        $region43: #{self_attention_batch.1} parent=35 // pred_region
          %802 = vsyncadd %s790, 0
          %s803 = smul.addr %s23, 8
          %s804 = scalar_lea.hbm %s4, %s803
          %s806 = sshll.u32 %s793, 4
          %s807 = int_to_ptr.vmem [resolvable:$true] %s806
          %s808 = sshll.u32 %s804, 4
          %s809 = int_to_ptr.hbm [resolvable:$true] %s808
          %811 = dma.vmem_to_hbm [thread:$0]  %s807, 128, %s809, %s790
        $region44: #{self_attention_batch.1} parent=35 // pred_fallthru
          _
        // Predicated region
        $region45: #{self_attention_batch.1} parent=35 // pred_check
          %p812 = pneg %p161
        $region46: #{self_attention_batch.1} parent=35 // pred_check_branch
          %814 = sbr.rel (%p812) target = $region48
        $region47: #{self_attention_batch.1} parent=35 // pred_region
          _
        $region48: #{self_attention_batch.1} parent=35 // pred_fallthru
          _
      $region36: #{self_attention_batch.1} parent=5 // pred_fallthru
        _
      %p815 = scmp.le.s32.totalorder 2, %s18
      // Predicated region
      $region49: #{self_attention_batch.1} parent=5 // pred_check
        %p816 = pneg %p815
      $region50: #{self_attention_batch.1} parent=5 // pred_check_branch
        %818 = sbr.rel (%p816) target = $region52
      $region51: #{self_attention_batch.1} parent=5 // pred_region
        %s819 = ssub.s32 %s18, 2
        // Predicated region
        $region53: #{self_attention_batch.1} parent=51 // pred_check
          %p820 = pneg %p141
        $region54: #{self_attention_batch.1} parent=51 // pred_check_branch
          %822 = sbr.rel (%p820) target = $region56
        $region55: #{self_attention_batch.1} parent=51 // pred_region
          %s823 = sand.u32 %s126, 1
          %s824 = scalar_lea.sflag [#allocation4], %s823
          %s825 = sand.u32 %s126, 1
          %s826 = smul.addr %s825, 8
          %s827 = scalar_lea.vmem [#allocation5], %s826
          %829 = dma.done %s824, 128
        $region56: #{self_attention_batch.1} parent=51 // pred_fallthru
          _
        // Predicated region
        $region57: #{self_attention_batch.1} parent=51 // pred_check
          %p830 = pneg %p167
        $region58: #{self_attention_batch.1} parent=51 // pred_check_branch
          %832 = sbr.rel (%p830) target = $region60
        $region59: #{self_attention_batch.1} parent=51 // pred_region
          %p833 = scmp.lt.s32.totalorder %s24, 1
          %s834 = scalar_select %p833, %s24, 1
          %s835 = smul.addr %s834, 8
          %s836 = scalar_lea.vmem %s5, %s835
        $region60: #{self_attention_batch.1} parent=51 // pred_fallthru
          _
      $region52: #{self_attention_batch.1} parent=5 // pred_fallthru
        _
    $region6: #{self_attention_batch.1} parent=1 // loop_footer
      %s22 = sadd.s32 1, %s18
    $region7: #{self_attention_batch.1} parent=1 // loop_footer_branch
      %17 = sbr.rel target = $region3
    $region8: #{self_attention_batch.1} parent=1 // loop_exit
      _
    %837 = vsyncpa [#allocation3], 1
    %s838 = scalar_lea.sflag [#allocation3], 1
    %839 = vsyncpa %s838, 1
    %840 = vsyncpa [#allocation4], 1
    %s841 = scalar_lea.sflag [#allocation4], 1
    %842 = vsyncpa %s841, 1

</llo_original>
